<compile_context>
chip_gen: v5e
topology: v5e:2x2
jax: 0.10.0
libtpu: 0.0.40
codegen_flags: <defaults>
</compile_context>

<pallas_src>
import functools

import jax
import jax.numpy as jnp
from jax import lax
from jax.experimental import pallas as pl
from jax.experimental.pallas import tpu as pltpu


def _nce_kernel(ids_col_ref, ids_row_ref, x1_ref, x2_ref, loss_ref, *,
                temperature, has_intent, use_bf16):
    x1 = x1_ref[...].astype(jnp.float32)
    x2 = x2_ref[...].astype(jnp.float32)
    b = x1.shape[0]

    # F.normalize(p=2, dim=1):  x / max(||x||, eps)  ==  x * rsqrt(max(sumsq, eps^2))
    eps2 = jnp.float32(1e-24)
    x1n = x1 * lax.rsqrt(jnp.maximum(jnp.sum(x1 * x1, axis=-1, keepdims=True), eps2))
    x2n = x2 * lax.rsqrt(jnp.maximum(jnp.sum(x2 * x2, axis=-1, keepdims=True), eps2))

    inv_t = jnp.float32(1.0 / temperature)

    # Correct-class logit for every row of both halves: sim12[i, i].
    # (mask_12 never touches the diagonal by construction.)
    diag = jnp.sum(x1n * x2n, axis=-1, keepdims=True) * inv_t  # (B, 1), f32

    # NT matmuls on the MXU (contract last dims of both operands); f32 accumulate.
    if use_bf16:
        a1 = x1n.astype(jnp.bfloat16)
        a2 = x2n.astype(jnp.bfloat16)
    else:
        a1, a2 = x1n, x2n
    nt = (((1,), (1,)), ((), ()))
    dg = functools.partial(lax.dot_general, dimension_numbers=nt,
                           preferred_element_type=jnp.float32)
    sim11 = dg(a1, a1) * inv_t
    sim22 = dg(a2, a2) * inv_t
    sim12 = dg(a1, a2) * inv_t
    sim21 = dg(a2, a1) * inv_t  # == sim12.T, but no XLU transpose

    # In-kernel masks (large finite negative instead of -inf).
    neg = jnp.float32(-1e30)
    row = lax.broadcasted_iota(jnp.int32, (b, b), 0)
    col = lax.broadcasted_iota(jnp.int32, (b, b), 1)
    eye = row == col
    if has_intent:
        same = ids_col_ref[...] == ids_row_ref[...]          # (B,1)==(1,B) -> (B,B)
        m11 = same
        m12 = jnp.logical_and(same, jnp.logical_not(eye))    # symmetric; diag never masked
        sim12 = jnp.where(m12, neg, sim12)
        sim21 = jnp.where(m12, neg, sim21)                   # m12 symmetric == masking sim12.T
    else:
        m11 = eye
    sim11 = jnp.where(m11, neg, sim11)
    sim22 = jnp.where(m11, neg, sim22)

    # Per-half online log-sum-exp — never build the (2B, 2B) logits.
    # Top rows   i   : logits = [sim12[i], sim11[i]], label -> sim12[i, i] = diag[i]
    # Bottom rows B+i: logits = [sim22[i], sim21[i]], label -> sim21[i, i] = diag[i]
    m_top = jnp.maximum(jnp.max(sim12, axis=-1, keepdims=True),
                        jnp.max(sim11, axis=-1, keepdims=True))
    lse_top = jnp.log(jnp.sum(jnp.exp(sim12 - m_top), axis=-1, keepdims=True)
                      + jnp.sum(jnp.exp(sim11 - m_top), axis=-1, keepdims=True)) + m_top
    m_bot = jnp.maximum(jnp.max(sim22, axis=-1, keepdims=True),
                        jnp.max(sim21, axis=-1, keepdims=True))
    lse_bot = jnp.log(jnp.sum(jnp.exp(sim22 - m_bot), axis=-1, keepdims=True)
                      + jnp.sum(jnp.exp(sim21 - m_bot), axis=-1, keepdims=True)) + m_bot

    # CrossEntropyLoss (mean over 2B rows): mean_i [ lse_i - correct_logit_i ]
    loss_ref[0, 0] = (jnp.sum(lse_top - diag) + jnp.sum(lse_bot - diag)) / jnp.float32(2 * b)


def nce_loss(batch_sample_one, batch_sample_two, temperature, intent_ids=None,
             *, use_bf16_matmul=True):
    """Pallas implementation of NCELoss.forward."""
    b = batch_sample_one.shape[0]
    has_intent = intent_ids is not None
    if has_intent:
        ids = intent_ids.astype(jnp.int32)
    else:
        ids = jnp.zeros((b,), jnp.int32)  # dummy, ignored when has_intent=False
    ids_col = ids.reshape(b, 1)
    ids_row = ids.reshape(1, b)

    kernel = functools.partial(
        _nce_kernel,
        temperature=float(temperature),
        has_intent=has_intent,
        use_bf16=use_bf16_matmul,
    )
    vmem = pl.BlockSpec(memory_space=pltpu.MemorySpace.VMEM)
    out = pl.pallas_call(
        kernel,
        out_shape=jax.ShapeDtypeStruct((1, 1), jnp.float32),
        in_specs=[vmem, vmem, vmem, vmem],
        out_specs=pl.BlockSpec(memory_space=pltpu.MemorySpace.SMEM),
    )(ids_col, ids_row, batch_sample_one, batch_sample_two)
    return out[0, 0]


def _nce_loss_ref(x1, x2, temperature, intent_ids=None):
    # Pure-JAX reference mirroring the PyTorch module, for a sanity check.
    def norm(x):
        n = jnp.linalg.norm(x, axis=1, keepdims=True)
        return x / jnp.maximum(n, 1e-12)

    x1, x2 = norm(x1), norm(x2)
    sim11 = x1 @ x1.T / temperature
    sim22 = x2 @ x2.T / temperature
    sim12 = x1 @ x2.T / temperature
    d = sim12.shape[-1]
    eye = jnp.eye(d, dtype=bool)
    if intent_ids is None:
        sim11 = jnp.where(eye, -jnp.inf, sim11)
        sim22 = jnp.where(eye, -jnp.inf, sim22)
    else:
        ids = intent_ids.reshape(-1, 1)
        m = ids == ids.T
        sim11 = jnp.where(m, -jnp.inf, sim11)
        sim22 = jnp.where(m, -jnp.inf, sim22)
        sim12 = jnp.where(m & (~eye), -jnp.inf, sim12)
    logits = jnp.concatenate(
        [jnp.concatenate([sim12, sim11], axis=-1),
         jnp.concatenate([sim22, sim12.T], axis=-1)], axis=0)
    labels = jnp.arange(2 * d)
    logp = jax.nn.log_softmax(logits, axis=-1)
    return -jnp.mean(logp[jnp.arange(2 * d), labels])


if __name__ == "__main__":
    B, D = 8, 32
    temperature = 0.5

    key = jax.random.PRNGKey(0)
    k1, k2, k3 = jax.random.split(key, 3)
    x1 = jax.random.normal(k1, (B, D), dtype=jnp.float32)
    x2 = jax.random.normal(k2, (B, D), dtype=jnp.float32)
    intent_ids = jax.random.randint(k3, (B,), 0, 3)

    # f32-operand path: bit-for-bit-ish check against the reference.
    for ids in (None, intent_ids):
        got = jax.block_until_ready(
            nce_loss(x1, x2, temperature, ids, use_bf16_matmul=False))
        ref = _nce_loss_ref(x1, x2, temperature, ids)
        assert jnp.allclose(got, ref, atol=1e-4, rtol=1e-4), (got, ref)

    # Default fast path (bf16 MXU operands, f32 accumulate): looser tolerance.
    for ids in (None, intent_ids):
        got = jax.block_until_ready(nce_loss(x1, x2, temperature, ids))
        ref = _nce_loss_ref(x1, x2, temperature, ids)
        assert jnp.allclose(got, ref, atol=3e-2, rtol=3e-2), (got, ref)

    print("KERNEL_OK")
</pallas_src>

<mosaic_0001>
module attributes {stable_mosaic.version = 11 : i64} {
  func.func @_nce_kernel(%arg0: memref<8x1xi32, #tpu.memory_space<vmem>>, %arg1: memref<1x8xi32, #tpu.memory_space<vmem>>, %arg2: memref<8x32xf32, #tpu.memory_space<vmem>>, %arg3: memref<8x32xf32, #tpu.memory_space<vmem>>, %arg4: memref<1x1xf32, #tpu.memory_space<smem>>) attributes {dimension_semantics = [], scalar_prefetch = 0 : i64, scratch_operands = 0 : i64, tpu.core_type = #tpu.core_type<tc>} {
    %c0 = arith.constant 0 : index
    %c0_0 = arith.constant 0 : index
    %0 = vector.load %arg2[%c0, %c0_0] : memref<8x32xf32, #tpu.memory_space<vmem>>, vector<8x32xf32>
    %c0_1 = arith.constant 0 : index
    %c0_2 = arith.constant 0 : index
    %1 = vector.load %arg3[%c0_1, %c0_2] : memref<8x32xf32, #tpu.memory_space<vmem>>, vector<8x32xf32>
    %2 = arith.mulf %0, %0 : vector<8x32xf32>
    %cst = arith.constant dense<0.000000e+00> : vector<8xf32>
    %3 = vector.multi_reduction <add>, %2, %cst [1] : vector<8x32xf32> to vector<8xf32>
    %4 = vector.shape_cast %3 : vector<8xf32> to vector<8x1xf32>
    %cst_3 = arith.constant 1.000000e-24 : f32
    %5 = vector.broadcast %cst_3 : f32 to vector<8x1xf32>
    %6 = arith.maximumf %4, %5 : vector<8x1xf32>
    %7 = math.rsqrt %6 : vector<8x1xf32>
    %8 = vector.broadcast %7 : vector<8x1xf32> to vector<8x32xf32>
    %9 = arith.mulf %0, %8 : vector<8x32xf32>
    %10 = arith.mulf %1, %1 : vector<8x32xf32>
    %cst_4 = arith.constant dense<0.000000e+00> : vector<8xf32>
    %11 = vector.multi_reduction <add>, %10, %cst_4 [1] : vector<8x32xf32> to vector<8xf32>
    %12 = vector.shape_cast %11 : vector<8xf32> to vector<8x1xf32>
    %cst_5 = arith.constant 1.000000e-24 : f32
    %13 = vector.broadcast %cst_5 : f32 to vector<8x1xf32>
    %14 = arith.maximumf %12, %13 : vector<8x1xf32>
    %15 = math.rsqrt %14 : vector<8x1xf32>
    %16 = vector.broadcast %15 : vector<8x1xf32> to vector<8x32xf32>
    %17 = arith.mulf %1, %16 : vector<8x32xf32>
    %18 = arith.mulf %9, %17 : vector<8x32xf32>
    %cst_6 = arith.constant dense<0.000000e+00> : vector<8xf32>
    %19 = vector.multi_reduction <add>, %18, %cst_6 [1] : vector<8x32xf32> to vector<8xf32>
    %20 = vector.shape_cast %19 : vector<8xf32> to vector<8x1xf32>
    %cst_7 = arith.constant 2.000000e+00 : f32
    %21 = vector.broadcast %cst_7 : f32 to vector<8x1xf32>
    %22 = arith.mulf %20, %21 : vector<8x1xf32>
    %cst_8 = arith.constant dense<0.000000e+00> : vector<8x8xf32>
    %23 = tpu.matmul %9, %9, %cst_8 {dimension_numbers = #tpu.dot_dimension_numbers<[1], [1], [0], [0], [0, 0, 1, 0], [], []>} : vector<8x32xf32>, vector<8x32xf32>, vector<8x8xf32> -> vector<8x8xf32>
    %cst_9 = arith.constant 2.000000e+00 : f32
    %24 = vector.broadcast %cst_9 : f32 to vector<8x8xf32>
    %25 = arith.mulf %23, %24 : vector<8x8xf32>
    %cst_10 = arith.constant dense<0.000000e+00> : vector<8x8xf32>
    %26 = tpu.matmul %17, %17, %cst_10 {dimension_numbers = #tpu.dot_dimension_numbers<[1], [1], [0], [0], [0, 0, 1, 0], [], []>} : vector<8x32xf32>, vector<8x32xf32>, vector<8x8xf32> -> vector<8x8xf32>
    %cst_11 = arith.constant 2.000000e+00 : f32
    %27 = vector.broadcast %cst_11 : f32 to vector<8x8xf32>
    %28 = arith.mulf %26, %27 : vector<8x8xf32>
    %cst_12 = arith.constant dense<0.000000e+00> : vector<8x8xf32>
    %29 = tpu.matmul %9, %17, %cst_12 {dimension_numbers = #tpu.dot_dimension_numbers<[1], [1], [0], [0], [0, 0, 1, 0], [], []>} : vector<8x32xf32>, vector<8x32xf32>, vector<8x8xf32> -> vector<8x8xf32>
    %cst_13 = arith.constant 2.000000e+00 : f32
    %30 = vector.broadcast %cst_13 : f32 to vector<8x8xf32>
    %31 = arith.mulf %29, %30 : vector<8x8xf32>
    %cst_14 = arith.constant dense<0.000000e+00> : vector<8x8xf32>
    %32 = tpu.matmul %17, %9, %cst_14 {dimension_numbers = #tpu.dot_dimension_numbers<[1], [1], [0], [0], [0, 0, 1, 0], [], []>} : vector<8x32xf32>, vector<8x32xf32>, vector<8x8xf32> -> vector<8x8xf32>
    %cst_15 = arith.constant 2.000000e+00 : f32
    %33 = vector.broadcast %cst_15 : f32 to vector<8x8xf32>
    %34 = arith.mulf %32, %33 : vector<8x8xf32>
    %35 = tpu.iota {dimensions = array<i32: 0>} : vector<8x8xi32>
    %36 = tpu.iota {dimensions = array<i32: 1>} : vector<8x8xi32>
    %37 = arith.cmpi eq, %35, %36 : vector<8x8xi32>
    %cst_16 = arith.constant -1.000000e+30 : f32
    %38 = vector.broadcast %cst_16 : f32 to vector<8x8xf32>
    %39 = arith.select %37, %38, %25 : vector<8x8xi1>, vector<8x8xf32>
    %cst_17 = arith.constant -1.000000e+30 : f32
    %40 = vector.broadcast %cst_17 : f32 to vector<8x8xf32>
    %41 = arith.select %37, %40, %28 : vector<8x8xi1>, vector<8x8xf32>
    %cst_18 = arith.constant dense<0xFF800000> : vector<8xf32>
    %42 = vector.multi_reduction <maximumf>, %31, %cst_18 [1] : vector<8x8xf32> to vector<8xf32>
    %43 = vector.shape_cast %42 : vector<8xf32> to vector<8x1xf32>
    %cst_19 = arith.constant dense<0xFF800000> : vector<8xf32>
    %44 = vector.multi_reduction <maximumf>, %39, %cst_19 [1] : vector<8x8xf32> to vector<8xf32>
    %45 = vector.shape_cast %44 : vector<8xf32> to vector<8x1xf32>
    %46 = arith.maximumf %43, %45 : vector<8x1xf32>
    %47 = vector.broadcast %46 : vector<8x1xf32> to vector<8x8xf32>
    %48 = arith.subf %31, %47 : vector<8x8xf32>
    %49 = math.exp %48 : vector<8x8xf32>
    %cst_20 = arith.constant dense<0.000000e+00> : vector<8xf32>
    %50 = vector.multi_reduction <add>, %49, %cst_20 [1] : vector<8x8xf32> to vector<8xf32>
    %51 = vector.shape_cast %50 : vector<8xf32> to vector<8x1xf32>
    %52 = vector.broadcast %46 : vector<8x1xf32> to vector<8x8xf32>
    %53 = arith.subf %39, %52 : vector<8x8xf32>
    %54 = math.exp %53 : vector<8x8xf32>
    %cst_21 = arith.constant dense<0.000000e+00> : vector<8xf32>
    %55 = vector.multi_reduction <add>, %54, %cst_21 [1] : vector<8x8xf32> to vector<8xf32>
    %56 = vector.shape_cast %55 : vector<8xf32> to vector<8x1xf32>
    %57 = arith.addf %51, %56 : vector<8x1xf32>
    %58 = math.log %57 : vector<8x1xf32>
    %59 = arith.addf %58, %46 : vector<8x1xf32>
    %cst_22 = arith.constant dense<0xFF800000> : vector<8xf32>
    %60 = vector.multi_reduction <maximumf>, %41, %cst_22 [1] : vector<8x8xf32> to vector<8xf32>
    %61 = vector.shape_cast %60 : vector<8xf32> to vector<8x1xf32>
    %cst_23 = arith.constant dense<0xFF800000> : vector<8xf32>
    %62 = vector.multi_reduction <maximumf>, %34, %cst_23 [1] : vector<8x8xf32> to vector<8xf32>
    %63 = vector.shape_cast %62 : vector<8xf32> to vector<8x1xf32>
    %64 = arith.maximumf %61, %63 : vector<8x1xf32>
    %65 = vector.broadcast %64 : vector<8x1xf32> to vector<8x8xf32>
    %66 = arith.subf %41, %65 : vector<8x8xf32>
    %67 = math.exp %66 : vector<8x8xf32>
    %cst_24 = arith.constant dense<0.000000e+00> : vector<8xf32>
    %68 = vector.multi_reduction <add>, %67, %cst_24 [1] : vector<8x8xf32> to vector<8xf32>
    %69 = vector.shape_cast %68 : vector<8xf32> to vector<8x1xf32>
    %70 = vector.broadcast %64 : vector<8x1xf32> to vector<8x8xf32>
    %71 = arith.subf %34, %70 : vector<8x8xf32>
    %72 = math.exp %71 : vector<8x8xf32>
    %cst_25 = arith.constant dense<0.000000e+00> : vector<8xf32>
    %73 = vector.multi_reduction <add>, %72, %cst_25 [1] : vector<8x8xf32> to vector<8xf32>
    %74 = vector.shape_cast %73 : vector<8xf32> to vector<8x1xf32>
    %75 = arith.addf %69, %74 : vector<8x1xf32>
    %76 = math.log %75 : vector<8x1xf32>
    %77 = arith.addf %76, %64 : vector<8x1xf32>
    %78 = arith.subf %59, %22 : vector<8x1xf32>
    %79 = vector.shape_cast %78 : vector<8x1xf32> to vector<1x8x1xf32>
    %cst_26 = arith.constant dense<0.000000e+00> : vector<1xf32>
    %80 = vector.multi_reduction <add>, %79, %cst_26 [1, 2] : vector<1x8x1xf32> to vector<1xf32>
    %81 = vector.shape_cast %80 : vector<1xf32> to vector<1x1x1xf32>
    %82 = vector.extract %81[0, 0, 0] : f32 from vector<1x1x1xf32>
    %83 = arith.subf %77, %22 : vector<8x1xf32>
    %84 = vector.shape_cast %83 : vector<8x1xf32> to vector<1x8x1xf32>
    %cst_27 = arith.constant dense<0.000000e+00> : vector<1xf32>
    %85 = vector.multi_reduction <add>, %84, %cst_27 [1, 2] : vector<1x8x1xf32> to vector<1xf32>
    %86 = vector.shape_cast %85 : vector<1xf32> to vector<1x1x1xf32>
    %87 = vector.extract %86[0, 0, 0] : f32 from vector<1x1x1xf32>
    %88 = arith.addf %82, %87 : f32
    %cst_28 = arith.constant 1.600000e+01 : f32
    %89 = arith.divf %88, %cst_28 : f32
    %c0_29 = arith.constant 0 : index
    %c0_30 = arith.constant 0 : index
    %90 = memref.load %arg4[%c0_29, %c0_30] : memref<1x1xf32, #tpu.memory_space<smem>>
    memref.store %89, %arg4[%c0_29, %c0_30] : memref<1x1xf32, #tpu.memory_space<smem>>
    return
  }
}

</mosaic_0001>

<llo_original>
// kernel: tpu_custom_call.1
$region0: #{tpu_custom_call.1}
  #allocation0 [shape = 'u32[]', space=smem, size = 0x4, offset = 0x4, fixed_abs, tag = 'smem constant byte address 0x4 - core index']
  #allocation1 [shape = 'u32[72,128]{1,0:T(1,128)}', space=vmem, size = 0x9000, scoped, tag = 'internal scratch']
  %s0 = inlined_call_operand.vmem [shape: s32[8,1], index: 0, kind: input, shape index: {}]
  %s1 = inlined_call_operand.vmem [shape: s32[1,8], index: 1, kind: input, shape index: {}]
  %s2 = inlined_call_operand.vmem [shape: f32[8,32], index: 2, kind: input, shape index: {}]
  %s3 = inlined_call_operand.hbm [shape: f32[8,32], index: 3, kind: input, shape index: {}]
  %s4 = inlined_call_operand.hbm [shape: f32[1,1], index: 4, kind: output, shape index: {}]
  %s5 = sld [smem:[#allocation0]]
  $region30: #{tpu_custom_call.1} parent=0
    _
  %s7 = ssub.s32 1, %s5
  %s8 = scalar_select 0, %s7, %s5
  $region1: #{tpu_custom_call.1} parent=0
    #allocation2 [shape = 'u8[4096]{0}', space=vmem, size = 0x1000, scoped, tag = 'input window, operand 3, single buffered']
    #allocation3 [shape = 's32[1]{0}', space=sflag, size = 0x4, scoped, tag = 'scoped memory for tpu_custom_call.1']
    #allocation4 [shape = 's32[1]{0}', space=sflag, size = 0x4, scoped, tag = 'scoped memory for tpu_custom_call.1']
    #allocation5 [shape = 'u8[512]{0}', space=smem, size = 0x200, scoped, tag = 'output window, operand 0, single buffered']
    %9 = vsyncpa [#allocation3], 0
    %10 = vsyncpa [#allocation4], 0
    // Predicated region
    $region2: #{tpu_custom_call.1} parent=1 // pred_check
      _
    $region3: #{tpu_custom_call.1} parent=1 // pred_check_branch
      %12 = sbr.rel (0) target = $region5
    $region4: #{tpu_custom_call.1} parent=1 // pred_region
      _
    $region5: #{tpu_custom_call.1} parent=1 // pred_fallthru
      _
    // Predicated region
    $region6: #{tpu_custom_call.1} parent=1 // pred_check
      _
    $region7: #{tpu_custom_call.1} parent=1 // pred_check_branch
      %14 = sbr.rel (0) target = $region9
    $region8: #{tpu_custom_call.1} parent=1 // pred_region
      _
    $region9: #{tpu_custom_call.1} parent=1 // pred_fallthru
      _
    // Predicated region
    $region10: #{tpu_custom_call.1} parent=1 // pred_check
      _
    $region11: #{tpu_custom_call.1} parent=1 // pred_check_branch
      %16 = sbr.rel (0) target = $region13
    $region12: #{tpu_custom_call.1} parent=1 // pred_region
      _
    $region13: #{tpu_custom_call.1} parent=1 // pred_fallthru
      _
    // Predicated region
    $region14: #{tpu_custom_call.1} parent=1 // pred_check
      _
    $region15: #{tpu_custom_call.1} parent=1 // pred_check_branch
      %18 = sbr.rel (0) target = $region17
    $region16: #{tpu_custom_call.1} parent=1 // pred_region
      %20 = vsyncadd [#allocation3], 0
      %s22 = sshll.u32 %s3, 4
      %s23 = int_to_ptr.hbm [resolvable:$true] %s22
      %s24 = sshll.u32 [#allocation2], 4
      %s25 = int_to_ptr.vmem [resolvable:$true] %s24
      %27 = dma.hbm_to_vmem [thread:$0]  %s23, 128, %s25, [#allocation3]
    $region17: #{tpu_custom_call.1} parent=1 // pred_fallthru
      _
    // Predicated region
    $region18: #{tpu_custom_call.1} parent=1 // pred_check
      _
    $region19: #{tpu_custom_call.1} parent=1 // pred_check_branch
      %29 = sbr.rel (0) target = $region21
    $region20: #{tpu_custom_call.1} parent=1 // pred_region
      %31 = dma.done [#allocation3], 128
    $region21: #{tpu_custom_call.1} parent=1 // pred_fallthru
      _
    %v32 = vld [vmem:[%s2] sm:$0xff]
    %v33 = vld [vmem:[#allocation2] sm:$0xff]
    %v34 = vmul.f32 %v32, %v32
    %vm35 = vcmask 261120
    %v36 = vsel %vm35, %v34, 0.0
    %37 = vadd.xlane.f32.xlu0 %v36
    %v38 = vpop.xlane.xlu0 %37
    %v39 = vmax.f32 %v38, 1e-24
    %v40 = vrsqrt.pop %v39
    %v41 = vmul.f32 %v40, %v39
    %v42 = vmul.f32 %v41, %v40
    %v43 = vmul.f32 0.5, %v42
    %v44 = vsub.f32 1.5, %v43
    %v45 = vmul.f32 %v40, %v44
    %vm46 = vweird.f32 %v39
    %vm47 = vweird.f32 %v40
    %vm48 = vmor %vm46, %vm47
    %v49 = vsel %vm48, %v40, %v45
    %v50 = vmul.f32 %v32, %v49
    %v51 = vmul.f32 %v33, %v33
    %v52 = vsel %vm35, %v51, 0.0
    %53 = vadd.xlane.f32.xlu0 %v52
    %v54 = vpop.xlane.xlu0 %53
    %v55 = vmax.f32 %v54, 1e-24
    %v56 = vrsqrt.pop %v55
    %v57 = vmul.f32 %v56, %v55
    %v58 = vmul.f32 %v57, %v56
    %v59 = vmul.f32 0.5, %v58
    %v60 = vsub.f32 1.5, %v59
    %v61 = vmul.f32 %v56, %v60
    %vm62 = vweird.f32 %v55
    %vm63 = vweird.f32 %v56
    %vm64 = vmor %vm62, %vm63
    %v65 = vsel %vm64, %v56, %v61
    %v66 = vmul.f32 %v33, %v65
    %v67 = vmul.f32 %v50, %v66
    %v68 = vsel %vm35, %v67, 0.0
    %69 = vadd.xlane.f32.xlu0 %v68
    %v70 = vpop.xlane.xlu0 %69
    %v71 = vmul.f32 %v70, 2.0
    %v73 = vsel %vm35, %v50, 0
    %75 = vmatpush.xpose.msra.mxu0 0.0
    %76 = vmatpush.xpose.msra.mxu0 0.0
    %77 = vmatpush.xpose.msra.mxu0 0.0
    %78 = vmatpush.xpose.msra.mxu0 0.0
    %79 = vmatpush.xpose.msra.mxu0 0.0
    %80 = vmatpush.xpose.msra.mxu0 0.0
    %81 = vmatpush.xpose.msra.mxu0 0.0
    %82 = vmatpush.xpose.msra.mxu0 0.0
    %83 = vmatpush.xpose.msra.mxu0 0.0
    %84 = vmatpush.xpose.msra.mxu0 0.0
    %85 = vmatpush.xpose.msra.mxu0 0.0
    %86 = vmatpush.xpose.msra.mxu0 0.0
    %87 = vmatpush.xpose.msra.mxu0 0.0
    %88 = vmatpush.xpose.msra.mxu0 0.0
    %89 = vmatpush.xpose.msra.mxu0 0.0
    %90 = vmatpush.xpose.msra.mxu0 %v73
    %91 = vmatmul.f32.gmra.mxu0 %v73
    %v92 = vpop.f32.mrf.mxu0
    %v93 = vadd.f32 0.0, %v92
    %94 = vdwg.mxu0
    %v95 = vmul.f32 %v93, 2.0
    %v97 = vsel %vm35, %v66, 0
    %99 = vmatpush.xpose.msra.mxu0 0.0
    %100 = vmatpush.xpose.msra.mxu0 0.0
    %101 = vmatpush.xpose.msra.mxu0 0.0
    %102 = vmatpush.xpose.msra.mxu0 0.0
    %103 = vmatpush.xpose.msra.mxu0 0.0
    %104 = vmatpush.xpose.msra.mxu0 0.0
    %105 = vmatpush.xpose.msra.mxu0 0.0
    %106 = vmatpush.xpose.msra.mxu0 0.0
    %107 = vmatpush.xpose.msra.mxu0 0.0
    %108 = vmatpush.xpose.msra.mxu0 0.0
    %109 = vmatpush.xpose.msra.mxu0 0.0
    %110 = vmatpush.xpose.msra.mxu0 0.0
    %111 = vmatpush.xpose.msra.mxu0 0.0
    %112 = vmatpush.xpose.msra.mxu0 0.0
    %113 = vmatpush.xpose.msra.mxu0 0.0
    %114 = vmatpush.xpose.msra.mxu0 %v97
    %115 = vmatmul.f32.gmra.mxu0 %v97
    %v116 = vpop.f32.mrf.mxu0
    %v117 = vadd.f32 0.0, %v116
    %118 = vdwg.mxu0
    %v119 = vmul.f32 %v117, 2.0
    %120 = vmatpush.xpose.msra.mxu0 0.0
    %121 = vmatpush.xpose.msra.mxu0 0.0
    %122 = vmatpush.xpose.msra.mxu0 0.0
    %123 = vmatpush.xpose.msra.mxu0 0.0
    %124 = vmatpush.xpose.msra.mxu0 0.0
    %125 = vmatpush.xpose.msra.mxu0 0.0
    %126 = vmatpush.xpose.msra.mxu0 0.0
    %127 = vmatpush.xpose.msra.mxu0 0.0
    %128 = vmatpush.xpose.msra.mxu0 0.0
    %129 = vmatpush.xpose.msra.mxu0 0.0
    %130 = vmatpush.xpose.msra.mxu0 0.0
    %131 = vmatpush.xpose.msra.mxu0 0.0
    %132 = vmatpush.xpose.msra.mxu0 0.0
    %133 = vmatpush.xpose.msra.mxu0 0.0
    %134 = vmatpush.xpose.msra.mxu0 0.0
    %135 = vmatpush.xpose.msra.mxu0 %v97
    %136 = vmatmul.f32.gmra.mxu0 %v73
    %v137 = vpop.f32.mrf.mxu0
    %v138 = vadd.f32 0.0, %v137
    %139 = vdwg.mxu0
    %v140 = vmul.f32 %v138, 2.0
    %141 = vmatpush.xpose.msra.mxu0 0.0
    %142 = vmatpush.xpose.msra.mxu0 0.0
    %143 = vmatpush.xpose.msra.mxu0 0.0
    %144 = vmatpush.xpose.msra.mxu0 0.0
    %145 = vmatpush.xpose.msra.mxu0 0.0
    %146 = vmatpush.xpose.msra.mxu0 0.0
    %147 = vmatpush.xpose.msra.mxu0 0.0
    %148 = vmatpush.xpose.msra.mxu0 0.0
    %149 = vmatpush.xpose.msra.mxu0 0.0
    %150 = vmatpush.xpose.msra.mxu0 0.0
    %151 = vmatpush.xpose.msra.mxu0 0.0
    %152 = vmatpush.xpose.msra.mxu0 0.0
    %153 = vmatpush.xpose.msra.mxu0 0.0
    %154 = vmatpush.xpose.msra.mxu0 0.0
    %155 = vmatpush.xpose.msra.mxu0 0.0
    %156 = vmatpush.xpose.msra.mxu0 %v73
    %157 = vmatmul.f32.gmra.mxu0 %v97
    %v158 = vpop.f32.mrf.mxu0
    %v159 = vadd.f32 0.0, %v158
    %160 = vdwg.mxu0
    %v161 = vmul.f32 %v159, 2.0
    %v162 = vlaneseq
    %v163 = vshrl.u32 %v162, 7
    %v164 = vlaneseq
    %v165 = vand.u32 %v164, 127
    %vm166 = vcmp.eq.s32.totalorder %v163, %v165
    %v167 = vsel %vm166, -1e+30, %v95
    %v168 = vsel %vm166, -1e+30, %v119
    %vm169 = vcmask 64512
    %v170 = vsel %vm169, %v140, -inf
    %171 = vmax.xlane.f32.xlu0 %v170
    %v172 = vpop.xlane.xlu0 %171
    %v173 = vsel %vm169, %v167, -inf
    %174 = vmax.xlane.f32.xlu0 %v173
    %v175 = vpop.xlane.xlu0 %174
    %v176 = vmax.f32 %v172, %v175
    %v177 = vsub.f32 %v140, %v176
    %v178 = vmul.f32 %v177, 1.442695
    %v179 = vpow.pop %v178
    %v180 = vsel %vm169, %v179, 0.0
    %181 = vadd.xlane.f32.xlu0 %v180
    %v182 = vpop.xlane.xlu0 %181
    %v183 = vsub.f32 %v167, %v176
    %v184 = vmul.f32 %v183, 1.442695
    %v185 = vpow.pop %v184
    %v186 = vsel %vm169, %v185, 0.0
    %187 = vadd.xlane.f32.xlu0 %v186
    %v188 = vpop.xlane.xlu0 %187
    %v189 = vadd.f32 %v182, %v188
    %v190 = vlog2.pop %v189
    %v191 = vmul.f32 %v190, 0.6931472
    %v192 = vadd.f32 %v191, %v176
    %v193 = vsel %vm169, %v168, -inf
    %194 = vmax.xlane.f32.xlu0 %v193
    %v195 = vpop.xlane.xlu0 %194
    %v196 = vsel %vm169, %v161, -inf
    %197 = vmax.xlane.f32.xlu0 %v196
    %v198 = vpop.xlane.xlu0 %197
    %v199 = vmax.f32 %v195, %v198
    %v200 = vsub.f32 %v168, %v199
    %v201 = vmul.f32 %v200, 1.442695
    %v202 = vpow.pop %v201
    %v203 = vsel %vm169, %v202, 0.0
    %204 = vadd.xlane.f32.xlu0 %v203
    %v205 = vpop.xlane.xlu0 %204
    %v206 = vsub.f32 %v161, %v199
    %v207 = vmul.f32 %v206, 1.442695
    %v208 = vpow.pop %v207
    %v209 = vsel %vm169, %v208, 0.0
    %210 = vadd.xlane.f32.xlu0 %v209
    %v211 = vpop.xlane.xlu0 %210
    %v212 = vadd.f32 %v205, %v211
    %v213 = vlog2.pop %v212
    %v214 = vmul.f32 %v213, 0.6931472
    %v215 = vadd.f32 %v214, %v199
    %v216 = vsub.f32 %v192, %v71
    %vm217 = vcmask 7168
    %v218 = vsel %vm217, %v216, 0.0
    %219 = vadd.xlane.f32.xlu0 %v218
    %v220 = vpop.xlane.xlu0 %219
    %v221 = vrot.slane %v220, 4
    %v222 = vadd.f32 %v220, %v221
    %v223 = vrot.slane %v222, 2
    %v224 = vadd.f32 %v222, %v223
    %v225 = vrot.slane %v224, 1
    %v226 = vadd.f32 %v224, %v225
    %s227 = vtos %v226
    %v228 = vsub.f32 %v215, %v71
    %v229 = vsel %vm217, %v228, 0.0
    %230 = vadd.xlane.f32.xlu0 %v229
    %v231 = vpop.xlane.xlu0 %230
    %v232 = vrot.slane %v231, 4
    %v233 = vadd.f32 %v231, %v232
    %v234 = vrot.slane %v233, 2
    %v235 = vadd.f32 %v233, %v234
    %v236 = vrot.slane %v235, 1
    %v237 = vadd.f32 %v235, %v236
    %s238 = vtos %v237
    %s239 = sadd.f32 %s227, %s238
    %v240 = vrcp.pop 16.0
    %v241 = vmul.f32 16.0, %v240
    %v242 = vsub.f32 1.0, %v241
    %v243 = vmul.f32 %v240, %v242
    %v244 = vadd.f32 %v240, %v243
    %vm245 = vweird.f32 %v240
    %v246 = vsel %vm245, %v240, %v244
    %s247 = vtos %v246
    %s248 = smul.f32 %s239, %s247
    %s249 = scalar_lea.smem [#allocation5], 0
    %250 = sst [smem:[%s249]] %s248
    // Predicated region
    $region22: #{tpu_custom_call.1} parent=1 // pred_check
      _
    $region23: #{tpu_custom_call.1} parent=1 // pred_check_branch
      %252 = sbr.rel (0) target = $region25
    $region24: #{tpu_custom_call.1} parent=1 // pred_region
      %254 = vsyncadd [#allocation4], 0
      %s256 = sshll.u32 %s4, 4
      %s257 = int_to_ptr.hbm [resolvable:$true] %s256
      %259 = dma.smem_to_hbm [#allocation5], 16, %s257, [#allocation4]
    $region25: #{tpu_custom_call.1} parent=1 // pred_fallthru
      _
    // Predicated region
    $region26: #{tpu_custom_call.1} parent=1 // pred_check
      _
    $region27: #{tpu_custom_call.1} parent=1 // pred_check_branch
      %261 = sbr.rel (0) target = $region29
    $region28: #{tpu_custom_call.1} parent=1 // pred_region
      %263 = dma.done [#allocation4], 16
    $region29: #{tpu_custom_call.1} parent=1 // pred_fallthru
      _
    %264 = sfence
    %265 = vsyncpa [#allocation3], 1
    %266 = vsyncpa [#allocation4], 1

</llo_original>
